<compile_context>
chip_gen: v6e
topology: v6e:2x2x1
jax: 0.10.0
libtpu: 0.0.40
codegen_flags: <defaults>
</compile_context>

<pallas_src>
import jax
import jax.numpy as jnp
from jax.experimental import pallas as pl
from jax.experimental.pallas import tpu as pltpu

LANES = 128
BLOCK_BYTES = 4 << 20          # 4 MiB per block (per direction)
VMEM_LIMIT_BYTES = 32 << 20    # raise v5e's 16 MiB scoped default; <= all chips' physical


def _make_qrelu_kernel(t: int):
    t_f = float(t)
    inv_t = 1.0 / t_f  # t is a power of two in practice -> exact

    def qrelu_kernel(up_ref, x_ref, o_ref):
        up = up_ref[0]             # f32 scalar from SMEM
        inv_up = 1.0 / up          # scalar reciprocal, once per grid step
        x = x_ref[...].astype(jnp.float32)   # compute in f32 (v5e VPU has no bf16 math)
        y = x * inv_up
        y = jnp.floor(y * t_f + 0.5) * inv_t
        y = jnp.clip(y, 0.0, 1.0)
        o_ref[...] = (y * up).astype(o_ref.dtype)

    return qrelu_kernel


def _qrelu_fused_jnp(x, up_scalar, t):
    y = x.astype(jnp.float32) / up_scalar
    y = jnp.floor(y * float(t) + 0.5) / float(t)
    y = jnp.clip(y, 0.0, 1.0)
    return (y * up_scalar).astype(x.dtype)


def qrelu(x: jax.Array, up: jax.Array, t: int = 32, block_rows: int | None = None) -> jax.Array:
    """Apply qReLU elementwise. `x` may be any shape (e.g. NCHW); `up` has shape (1,)."""
    orig_shape = x.shape
    dtype = x.dtype
    n = x.size
    if n == 0:
        return x

    up_f32 = up.astype(jnp.float32).reshape(1)

    if n % LANES != 0:
        # Rare ragged case: a single fused XLA pass is optimal (one HBM read +
        # one write); a Pallas path here would need pad/slice round-trips.
        return _qrelu_fused_jnp(x, up_f32[0], t).reshape(orig_shape)

    rows = n // LANES
    x2d = x.reshape(rows, LANES)   # free bitcast reshape for contiguous input

    if block_rows is None:
        itemsize = jnp.dtype(dtype).itemsize
        # 4 MiB per block; always a multiple of 32 rows -> valid for f32/bf16/int8 tiles.
        block_rows = max(32, BLOCK_BYTES // (LANES * itemsize))
    block_rows = min(block_rows, rows)   # == rows (full dim) when the tensor is small
    grid = (pl.cdiv(rows, block_rows),)  # partial last block is masked by Pallas

    out2d = pl.pallas_call(
        _make_qrelu_kernel(t),
        out_shape=jax.ShapeDtypeStruct((rows, LANES), dtype),
        grid_spec=pltpu.PrefetchScalarGridSpec(
            num_scalar_prefetch=0,
            grid=grid,
            in_specs=[
                pl.BlockSpec(memory_space=pltpu.MemorySpace.SMEM),     # up (1,) scalar
                pl.BlockSpec((block_rows, LANES), lambda i: (i, 0)),   # x row-block
            ],
            out_specs=pl.BlockSpec((block_rows, LANES), lambda i: (i, 0)),
        ),
        compiler_params=pltpu.CompilerParams(
            dimension_semantics=("parallel",),
            vmem_limit_bytes=VMEM_LIMIT_BYTES,
        ),
    )(up_f32, x2d)

    return out2d.reshape(orig_shape)


class QReLUModule:
    """Mirror of the PyTorch qReLU module (deterministic init, forward only)."""
    # TODO(synk): GradFloor's custom (straight-through) backward is not implemented;
    # this is the forward pass only.

    def __init__(self, up: float = 2.0, t: int = 32):
        self.up = jnp.array([up], dtype=jnp.float32)   # nn.Parameter(torch.tensor([up]))
        self.t = t

    def __call__(self, x: jax.Array) -> jax.Array:
        return qrelu(x, self.up, self.t)


def qrelu_ref(x, up, t):
    """Pure-JAX reference mirroring the PyTorch forward exactly."""
    y = x / up
    y = jnp.floor(y * t + 0.5) / t
    y = jnp.clip(y, 0.0, 1.0)
    return y * up


if __name__ == "__main__":
    key = jax.random.PRNGKey(0)
    mod = QReLUModule(up=2.0, t=32)

    # Main path: NCHW feature map, n % 128 == 0, single lane-dense block.
    x = jax.random.normal(key, (2, 4, 16, 16), dtype=jnp.float32) * 3.0
    out = jax.block_until_ready(mod(x))
    ref = qrelu_ref(x, mod.up[0], float(mod.t))
    assert out.shape == x.shape
    assert out.dtype == x.dtype
    assert jnp.allclose(out, ref, atol=1e-6), "mismatch vs reference (aligned)"

    # Partial-block masking path: rows = 13, block_rows = 8 -> grid of 2 with a
    # masked final block (no padding, no slicing).
    x2 = jax.random.normal(jax.random.PRNGKey(1), (2, 13, 8, 8), dtype=jnp.float32) * 3.0
    out2 = jax.block_until_ready(qrelu(x2, mod.up, mod.t, block_rows=8))
    ref2 = qrelu_ref(x2, mod.up[0], float(mod.t))
    assert jnp.allclose(out2, ref2, atol=1e-6), "mismatch vs reference (partial block)"

    # Ragged-size fallback path (n % 128 != 0): fused jnp, semantics identical.
    x3 = jax.random.normal(jax.random.PRNGKey(2), (3, 7, 9, 5), dtype=jnp.float32) * 3.0
    out3 = jax.block_until_ready(qrelu(x3, mod.up, mod.t))
    ref3 = qrelu_ref(x3, mod.up[0], float(mod.t))
    assert jnp.allclose(out3, ref3, atol=1e-6), "mismatch vs reference (ragged)"

    print("KERNEL_OK")
</pallas_src>

<mosaic_0001>
module attributes {stable_mosaic.version = 11 : i64} {
  func.func @qrelu_kernel(%arg0: i32, %arg1: memref<1xf32, #tpu.memory_space<smem>>, %arg2: memref<16x128xf32, #tpu.memory_space<vmem>>, %arg3: memref<16x128xf32, #tpu.memory_space<vmem>>) attributes {dimension_semantics = [#tpu.dimension_semantics<parallel>], iteration_bounds = array<i64: 1>, scalar_prefetch = 0 : i64, scratch_operands = 0 : i64, tpu.core_type = #tpu.core_type<tc>, window_params = [{transform_indices = @transform_0, window_bounds = array<i64: 1>}, {transform_indices = @transform_1, window_bounds = array<i64: 16, 128>}, {transform_indices = @transform_2, window_bounds = array<i64: 16, 128>}]} {
    %c0 = arith.constant 0 : index
    %0 = memref.load %arg1[%c0] : memref<1xf32, #tpu.memory_space<smem>>
    %cst = arith.constant 1.000000e+00 : f32
    %1 = arith.divf %cst, %0 : f32
    %c0_0 = arith.constant 0 : index
    %c0_1 = arith.constant 0 : index
    %2 = vector.load %arg2[%c0_0, %c0_1] : memref<16x128xf32, #tpu.memory_space<vmem>>, vector<16x128xf32>
    %3 = vector.broadcast %1 : f32 to vector<16x128xf32>
    %4 = arith.mulf %2, %3 : vector<16x128xf32>
    %cst_2 = arith.constant 3.200000e+01 : f32
    %5 = vector.broadcast %cst_2 : f32 to vector<16x128xf32>
    %6 = arith.mulf %4, %5 : vector<16x128xf32>
    %cst_3 = arith.constant 5.000000e-01 : f32
    %7 = vector.broadcast %cst_3 : f32 to vector<16x128xf32>
    %8 = arith.addf %6, %7 : vector<16x128xf32>
    %9 = math.floor %8 : vector<16x128xf32>
    %cst_4 = arith.constant 3.125000e-02 : f32
    %10 = vector.broadcast %cst_4 : f32 to vector<16x128xf32>
    %11 = arith.mulf %9, %10 : vector<16x128xf32>
    %cst_5 = arith.constant 0.000000e+00 : f32
    %cst_6 = arith.constant 1.000000e+00 : f32
    %12 = vector.broadcast %cst_5 : f32 to vector<16x128xf32>
    %13 = arith.maximumf %12, %11 : vector<16x128xf32>
    %14 = vector.broadcast %cst_6 : f32 to vector<16x128xf32>
    %15 = arith.minimumf %14, %13 : vector<16x128xf32>
    %16 = vector.broadcast %0 : f32 to vector<16x128xf32>
    %17 = arith.mulf %15, %16 : vector<16x128xf32>
    %c0_7 = arith.constant 0 : index
    %c0_8 = arith.constant 0 : index
    %18 = vector.load %arg3[%c0_7, %c0_8] : memref<16x128xf32, #tpu.memory_space<vmem>>, vector<16x128xf32>
    tpu.vector_store %arg3[%c0_7, %c0_8], %17 {strides = array<i32>} : memref<16x128xf32, #tpu.memory_space<vmem>>, vector<16x128xf32>,
    return
  }
  func.func @transform_0(%arg0: i32) -> i32 {
    %c0_i32 = arith.constant 0 : i32
    %c0_i32_0 = arith.constant 0 : i32
    return %c0_i32 : i32
  }
  func.func @transform_1(%arg0: i32) -> (i32, i32) {
    %c0_i32 = arith.constant 0 : i32
    %c0_i32_0 = arith.constant 0 : i32
    return %arg0, %c0_i32 : i32, i32
  }
  func.func @transform_2(%arg0: i32) -> (i32, i32) {
    %c0_i32 = arith.constant 0 : i32
    %c0_i32_0 = arith.constant 0 : i32
    return %arg0, %c0_i32 : i32, i32
  }
}

</mosaic_0001>

<llo_original>
// kernel: tpu_custom_call.1
$region0: #{tpu_custom_call.1}
  #allocation0 [shape = 'u32[]', space=smem, size = 0x4, offset = 0x4, fixed_abs, tag = 'smem constant byte address 0x4 - core index']
  #allocation1 [shape = 'u32[144,128]{1,0:T(1,128)}', space=vmem, size = 0x12000, scoped, tag = 'internal scratch']
  #allocation2 [shape = 'f32[1]{0:T(128)S(6)}', space=smem, size = 0x200, scoped, tag = 'scoped memory for tpu_custom_call.1']
  %s0 = inlined_call_operand.<no memory space> [shape: f32[1], index: 0, kind: input, shape index: {}]
  %s1 = inlined_call_operand.hbm [shape: f32[16,128], index: 1, kind: input, shape index: {}]
  %s2 = inlined_call_operand.hbm [shape: f32[16,128], index: 2, kind: output, shape index: {}]
  %s3 = sld [smem:[#allocation0]]
  $region22: #{tpu_custom_call.1} parent=0
    _
  %s5 = ssub.s32 1, %s3
  %s6 = scalar_select 0, %s5, %s3
  %7 = sst [smem:[#allocation2]] %s0
  $region1: #{tpu_custom_call.1} parent=0
    #allocation3 [shape = 'u8[8192]{0}', space=vmem, size = 0x2000, scoped, tag = 'input window, operand 1, single buffered']
    #allocation4 [shape = 's32[1]{0}', space=sflag, size = 0x4, scoped, tag = 'scoped memory for tpu_custom_call.1']
    #allocation5 [shape = 's32[1]{0}', space=sflag, size = 0x4, scoped, tag = 'scoped memory for tpu_custom_call.1']
    #allocation6 [shape = 'u8[8192]{0}', space=vmem, size = 0x2000, scoped, tag = 'output window, operand 0, single buffered']
    %8 = vsyncpa [#allocation4], 0
    %9 = vsyncpa [#allocation5], 0
    // Predicated region
    $region2: #{tpu_custom_call.1} parent=1 // pred_check
      _
    $region3: #{tpu_custom_call.1} parent=1 // pred_check_branch
      %11 = sbr.rel (0) target = $region5
    $region4: #{tpu_custom_call.1} parent=1 // pred_region
      _
    $region5: #{tpu_custom_call.1} parent=1 // pred_fallthru
      _
    // Predicated region
    $region6: #{tpu_custom_call.1} parent=1 // pred_check
      _
    $region7: #{tpu_custom_call.1} parent=1 // pred_check_branch
      %13 = sbr.rel (0) target = $region9
    $region8: #{tpu_custom_call.1} parent=1 // pred_region
      %s15 = ssub.s32 256, 256
      %16 = vsyncadd [#allocation4], %s15
      %s17 = sshll.u32 [#allocation3], 4
      %s18 = int_to_ptr.vmem [resolvable:$true] %s17
      %23 = dma.hbm_to_vmem [thread:$0]  %s1, 256, %s18, [#allocation4], 128, 128, 8
    $region9: #{tpu_custom_call.1} parent=1 // pred_fallthru
      _
    // Predicated region
    $region10: #{tpu_custom_call.1} parent=1 // pred_check
      _
    $region11: #{tpu_custom_call.1} parent=1 // pred_check_branch
      %25 = sbr.rel (0) target = $region13
    $region12: #{tpu_custom_call.1} parent=1 // pred_region
      %26 = dma.done [#allocation4], 256
    $region13: #{tpu_custom_call.1} parent=1 // pred_fallthru
      _
    %s27 = sld [smem:[#allocation2]]
    %v28 = vstv %s27
    %v29 = vrcp.pop %v28
    %s30 = vtos %v29
    %v31 = vld [vmem:[#allocation3] sm:$0xff]
    %v32 = vld [vmem:[#allocation3 + $0x8] sm:$0xff]
    %v33 = vstv %s30
    %v34 = vmul.f32 %v31, %v33
    %v35 = vmul.f32 %v32, %v33
    %v36 = vmul.f32 %v34, 32.0
    %v37 = vmul.f32 %v35, 32.0
    %v38 = vadd.f32 %v36, 0.5
    %v39 = vadd.f32 %v37, 0.5
    %v40 = vfloor.f32 %v38
    %v41 = vfloor.f32 %v39
    %v42 = vmul.f32 %v40, 0.03125
    %v43 = vmul.f32 %v41, 0.03125
    %v44 = vmax.f32 %v42, 0.0
    %v45 = vmax.f32 %v43, 0.0
    %v46 = vmin.f32 %v44, 1.0
    %v47 = vmin.f32 %v45, 1.0
    %v48 = vstv %s27
    %v49 = vmul.f32 %v46, %v48
    %v50 = vmul.f32 %v47, %v48
    %51 = vst [vmem:[#allocation6] sm:$0xff] %v49
    %52 = vst [vmem:[#allocation6 + $0x8] sm:$0xff] %v50
    // Predicated region
    $region14: #{tpu_custom_call.1} parent=1 // pred_check
      _
    $region15: #{tpu_custom_call.1} parent=1 // pred_check_branch
      %54 = sbr.rel (0) target = $region17
    $region16: #{tpu_custom_call.1} parent=1 // pred_region
      %s56 = ssub.s32 256, 256
      %57 = vsyncadd [#allocation5], %s56
      %s58 = sshll.u32 [#allocation6], 4
      %s59 = int_to_ptr.vmem [resolvable:$true] %s58
      %64 = dma.vmem_to_hbm [thread:$0]  %s59, 256, %s2, [#allocation5], 128, 128, 8
    $region17: #{tpu_custom_call.1} parent=1 // pred_fallthru
      _
    // Predicated region
    $region18: #{tpu_custom_call.1} parent=1 // pred_check
      _
    $region19: #{tpu_custom_call.1} parent=1 // pred_check_branch
      %66 = sbr.rel (0) target = $region21
    $region20: #{tpu_custom_call.1} parent=1 // pred_region
      %67 = dma.done [#allocation5], 256
    $region21: #{tpu_custom_call.1} parent=1 // pred_fallthru
      _
    %68 = vsyncpa [#allocation4], 1
    %69 = vsyncpa [#allocation5], 1

</llo_original>
